<compile_context>
chip_gen: v7x
topology: tpu7x:2x2x1
jax: 0.10.0
libtpu: 0.0.40
codegen_flags: <defaults>
</compile_context>

<pallas_src>
import functools

import jax
import jax.numpy as jnp
from jax.experimental import pallas as pl
from jax.experimental.pallas import tpu as pltpu

_LANE = 128     # lanes (fast axis) — 128 boxes per row
_TM_MAX = 512   # rows of 128 boxes per grid step:
                # 4 * 512 * 128 * 4 B = 1 MiB per input block
                # => 2 inputs x 2 pipeline buffers + output ≈ 4.5 MiB VMEM,
                # comfortably under the 32 MiB scoped default on v5e/v6e/v7x.


def _iou_loss_kernel(pred_ref, tgt_ref, out_ref, *, loss_type: str):
    # pred_ref / tgt_ref: (4, TM, LANE) blocks; out_ref: (TM, LANE) block.
    # Per-coordinate slices are dense (TM, LANE) operands.
    px, py, pw, ph = pred_ref[0], pred_ref[1], pred_ref[2], pred_ref[3]
    tx, ty, tw, th = tgt_ref[0], tgt_ref[1], tgt_ref[2], tgt_ref[3]

    # Half extents computed once and reused (also by the giou branch).
    phw, phh = pw * 0.5, ph * 0.5
    thw, thh = tw * 0.5, th * 0.5
    p_l, p_r = px - phw, px + phw
    p_t, p_b = py - phh, py + phh
    t_l, t_r = tx - thw, tx + thw
    t_t, t_b = ty - thh, ty + thh

    # Intersection top-left / bottom-right.
    tl_x = jnp.maximum(p_l, t_l)
    tl_y = jnp.maximum(p_t, t_t)
    br_x = jnp.minimum(p_r, t_r)
    br_y = jnp.minimum(p_b, t_b)

    area_p = pw * ph
    area_g = tw * th

    # en = prod over dims of (tl < br) cast to float == AND of both coords.
    en = ((tl_x < br_x) & (tl_y < br_y)).astype(px.dtype)
    area_i = (br_x - tl_x) * (br_y - tl_y) * en

    iou = area_i / (area_p + area_g - area_i + 1e-16)

    if loss_type == "iou":
        loss = 1.0 - iou * iou
    elif loss_type == "giou":
        c_tl_x = jnp.minimum(p_l, t_l)
        c_tl_y = jnp.minimum(p_t, t_t)
        c_br_x = jnp.maximum(p_r, t_r)
        c_br_y = jnp.maximum(p_b, t_b)
        area_c = (c_br_x - c_tl_x) * (c_br_y - c_tl_y)
        giou = iou - (area_c - area_i) / jnp.maximum(area_c, 1e-16)
        loss = 1.0 - jnp.clip(giou, -1.0, 1.0)
    else:
        raise ValueError(f"unknown loss_type {loss_type}")

    out_ref[...] = loss


def iou_loss(pred, target, reduction="none", loss_type="iou"):
    """Pallas implementation of IOUloss.forward.

    pred, target: (..., 4) float arrays (cx, cy, w, h).  Returns per-box loss
    of shape (N,) for reduction='none', or a scalar for 'mean'/'sum'.
    """
    assert pred.shape[0] == target.shape[0]
    pred = pred.reshape(-1, 4).astype(jnp.float32)
    target = target.reshape(-1, 4).astype(jnp.float32)
    n = pred.shape[0]

    # Coordinate-major layout: (N, 4) -> (4, N) -> pad -> (4, M_pad, 128).
    m = (n + _LANE - 1) // _LANE              # rows of 128 boxes
    tm = min(_TM_MAX, m)                      # rows per grid step
    m_pad = ((m + tm - 1) // tm) * tm         # rows padded to a grid multiple
    n_pad = m_pad * _LANE

    pred_t = jnp.pad(pred.T, ((0, 0), (0, n_pad - n))).reshape(4, m_pad, _LANE)
    tgt_t = jnp.pad(target.T, ((0, 0), (0, n_pad - n))).reshape(4, m_pad, _LANE)

    grid = (m_pad // tm,)
    kernel = functools.partial(_iou_loss_kernel, loss_type=loss_type)

    flops_per_box = 30 if loss_type == "iou" else 42
    out = pl.pallas_call(
        kernel,
        out_shape=jax.ShapeDtypeStruct((m_pad, _LANE), jnp.float32),
        grid_spec=pltpu.PrefetchScalarGridSpec(
            num_scalar_prefetch=0,
            grid=grid,
            in_specs=[
                pl.BlockSpec((4, tm, _LANE), lambda i: (0, i, 0)),
                pl.BlockSpec((4, tm, _LANE), lambda i: (0, i, 0)),
            ],
            out_specs=pl.BlockSpec((tm, _LANE), lambda i: (i, 0)),
        ),
        compiler_params=pltpu.CompilerParams(
            # Parallel grid axis -> megacore sharding on v7x (2 TCs).
            dimension_semantics=("parallel",),
        ),
        cost_estimate=pl.CostEstimate(
            flops=flops_per_box * n_pad,
            transcendentals=0,
            bytes_accessed=9 * 4 * n_pad,     # 8 f32 in + 1 f32 out per box
        ),
    )(pred_t, tgt_t)

    # Row-major (M_pad, 128) flattens back to box order; drop padding.
    loss = out.reshape(-1)[:n]

    # reduction is cheap glue; default module config is 'none'.
    # TODO(synk): for very large N with reduction='mean'/'sum' on v5e, fuse the
    # reduction into the kernel via an accumulator + pl.when on the last step.
    if reduction == "mean":
        loss = loss.mean()
    elif reduction == "sum":
        loss = loss.sum()
    return loss


def _iou_loss_ref(pred, target, reduction="none", loss_type="iou"):
    pred = pred.reshape(-1, 4)
    target = target.reshape(-1, 4)
    tl = jnp.maximum(pred[:, :2] - pred[:, 2:] / 2, target[:, :2] - target[:, 2:] / 2)
    br = jnp.minimum(pred[:, :2] + pred[:, 2:] / 2, target[:, :2] + target[:, 2:] / 2)
    area_p = jnp.prod(pred[:, 2:], 1)
    area_g = jnp.prod(target[:, 2:], 1)
    en = jnp.prod((tl < br).astype(tl.dtype), axis=1)
    area_i = jnp.prod(br - tl, 1) * en
    iou = area_i / (area_p + area_g - area_i + 1e-16)
    if loss_type == "iou":
        loss = 1 - iou ** 2
    else:
        c_tl = jnp.minimum(pred[:, :2] - pred[:, 2:] / 2, target[:, :2] - target[:, 2:] / 2)
        c_br = jnp.maximum(pred[:, :2] + pred[:, 2:] / 2, target[:, :2] + target[:, 2:] / 2)
        area_c = jnp.prod(c_br - c_tl, 1)
        giou = iou - (area_c - area_i) / jnp.maximum(area_c, 1e-16)
        loss = 1 - jnp.clip(giou, -1.0, 1.0)
    if reduction == "mean":
        loss = loss.mean()
    elif reduction == "sum":
        loss = loss.sum()
    return loss


def _make_boxes(key, n):
    k1, k2 = jax.random.split(key)
    xy = jax.random.uniform(k1, (n, 2), minval=0.0, maxval=16.0)
    wh = jax.random.uniform(k2, (n, 2), minval=1.0, maxval=8.0)
    return jnp.concatenate([xy, wh], axis=1)


if __name__ == "__main__":
    key = jax.random.PRNGKey(0)
    kp, kt, kp2, kt2 = jax.random.split(key, 4)

    # small deterministic example: 8 predicted / target boxes (cx, cy, w, h)
    n = 8
    pred = _make_boxes(kp, n)
    target = _make_boxes(kt, n)

    # default module config: reduction='none', loss_type='iou'
    loss = iou_loss(pred, target, reduction="none", loss_type="iou")
    loss = jax.block_until_ready(loss)
    ref = _iou_loss_ref(pred, target, reduction="none", loss_type="iou")
    assert loss.shape == (n,)
    assert jnp.allclose(loss, ref, atol=1e-5, rtol=1e-5)

    # also exercise the giou path for coverage
    loss_g = jax.block_until_ready(iou_loss(pred, target, loss_type="giou"))
    ref_g = _iou_loss_ref(pred, target, loss_type="giou")
    assert jnp.allclose(loss_g, ref_g, atol=1e-5, rtol=1e-5)

    # a larger case exercising the multi-step grid (grid > 1) and padding path
    n_big = 66_000  # -> 516 rows of 128, tm=512, grid=2
    pred_b = _make_boxes(kp2, n_big)
    target_b = _make_boxes(kt2, n_big)
    loss_b = jax.block_until_ready(iou_loss(pred_b, target_b))
    ref_b = _iou_loss_ref(pred_b, target_b)
    assert loss_b.shape == (n_big,)
    assert jnp.allclose(loss_b, ref_b, atol=1e-5, rtol=1e-5)

    # reduction glue
    loss_m = jax.block_until_ready(iou_loss(pred, target, reduction="mean"))
    assert jnp.allclose(loss_m, _iou_loss_ref(pred, target, reduction="mean"),
                        atol=1e-5, rtol=1e-5)

    print("KERNEL_OK")
</pallas_src>

<mosaic_0001>
module attributes {stable_mosaic.version = 11 : i64} {
  func.func @_iou_loss_kernel(%arg0: i32, %arg1: memref<4x1x128xf32, #tpu.memory_space<vmem>>, %arg2: memref<4x1x128xf32, #tpu.memory_space<vmem>>, %arg3: memref<1x128xf32, #tpu.memory_space<vmem>>) attributes {dimension_semantics = [#tpu.dimension_semantics<parallel>], iteration_bounds = array<i64: 1>, scalar_prefetch = 0 : i64, scratch_operands = 0 : i64, tpu.core_type = #tpu.core_type<tc>, window_params = [{transform_indices = @transform_0, window_bounds = array<i64: 4, 1, 128>}, {transform_indices = @transform_1, window_bounds = array<i64: 4, 1, 128>}, {transform_indices = @transform_2, window_bounds = array<i64: 1, 128>}]} {
    %c0 = arith.constant 0 : index
    %c0_0 = arith.constant 0 : index
    %c0_1 = arith.constant 0 : index
    %0 = vector.load %arg1[%c0, %c0_0, %c0_1] : memref<4x1x128xf32, #tpu.memory_space<vmem>>, vector<1x1x128xf32>
    %1 = vector.shape_cast %0 : vector<1x1x128xf32> to vector<1x128xf32>
    %c1 = arith.constant 1 : index
    %c0_2 = arith.constant 0 : index
    %c0_3 = arith.constant 0 : index
    %2 = vector.load %arg1[%c1, %c0_2, %c0_3] : memref<4x1x128xf32, #tpu.memory_space<vmem>>, vector<1x1x128xf32>
    %3 = vector.shape_cast %2 : vector<1x1x128xf32> to vector<1x128xf32>
    %c2 = arith.constant 2 : index
    %c0_4 = arith.constant 0 : index
    %c0_5 = arith.constant 0 : index
    %4 = vector.load %arg1[%c2, %c0_4, %c0_5] : memref<4x1x128xf32, #tpu.memory_space<vmem>>, vector<1x1x128xf32>
    %5 = vector.shape_cast %4 : vector<1x1x128xf32> to vector<1x128xf32>
    %c3 = arith.constant 3 : index
    %c0_6 = arith.constant 0 : index
    %c0_7 = arith.constant 0 : index
    %6 = vector.load %arg1[%c3, %c0_6, %c0_7] : memref<4x1x128xf32, #tpu.memory_space<vmem>>, vector<1x1x128xf32>
    %7 = vector.shape_cast %6 : vector<1x1x128xf32> to vector<1x128xf32>
    %c0_8 = arith.constant 0 : index
    %c0_9 = arith.constant 0 : index
    %c0_10 = arith.constant 0 : index
    %8 = vector.load %arg2[%c0_8, %c0_9, %c0_10] : memref<4x1x128xf32, #tpu.memory_space<vmem>>, vector<1x1x128xf32>
    %9 = vector.shape_cast %8 : vector<1x1x128xf32> to vector<1x128xf32>
    %c1_11 = arith.constant 1 : index
    %c0_12 = arith.constant 0 : index
    %c0_13 = arith.constant 0 : index
    %10 = vector.load %arg2[%c1_11, %c0_12, %c0_13] : memref<4x1x128xf32, #tpu.memory_space<vmem>>, vector<1x1x128xf32>
    %11 = vector.shape_cast %10 : vector<1x1x128xf32> to vector<1x128xf32>
    %c2_14 = arith.constant 2 : index
    %c0_15 = arith.constant 0 : index
    %c0_16 = arith.constant 0 : index
    %12 = vector.load %arg2[%c2_14, %c0_15, %c0_16] : memref<4x1x128xf32, #tpu.memory_space<vmem>>, vector<1x1x128xf32>
    %13 = vector.shape_cast %12 : vector<1x1x128xf32> to vector<1x128xf32>
    %c3_17 = arith.constant 3 : index
    %c0_18 = arith.constant 0 : index
    %c0_19 = arith.constant 0 : index
    %14 = vector.load %arg2[%c3_17, %c0_18, %c0_19] : memref<4x1x128xf32, #tpu.memory_space<vmem>>, vector<1x1x128xf32>
    %15 = vector.shape_cast %14 : vector<1x1x128xf32> to vector<1x128xf32>
    %cst = arith.constant 5.000000e-01 : f32
    %16 = vector.broadcast %cst : f32 to vector<1x128xf32>
    %17 = arith.mulf %5, %16 : vector<1x128xf32>
    %cst_20 = arith.constant 5.000000e-01 : f32
    %18 = vector.broadcast %cst_20 : f32 to vector<1x128xf32>
    %19 = arith.mulf %7, %18 : vector<1x128xf32>
    %cst_21 = arith.constant 5.000000e-01 : f32
    %20 = vector.broadcast %cst_21 : f32 to vector<1x128xf32>
    %21 = arith.mulf %13, %20 : vector<1x128xf32>
    %cst_22 = arith.constant 5.000000e-01 : f32
    %22 = vector.broadcast %cst_22 : f32 to vector<1x128xf32>
    %23 = arith.mulf %15, %22 : vector<1x128xf32>
    %24 = arith.subf %1, %17 : vector<1x128xf32>
    %25 = arith.addf %1, %17 : vector<1x128xf32>
    %26 = arith.subf %3, %19 : vector<1x128xf32>
    %27 = arith.addf %3, %19 : vector<1x128xf32>
    %28 = arith.subf %9, %21 : vector<1x128xf32>
    %29 = arith.addf %9, %21 : vector<1x128xf32>
    %30 = arith.subf %11, %23 : vector<1x128xf32>
    %31 = arith.addf %11, %23 : vector<1x128xf32>
    %32 = arith.maximumf %24, %28 : vector<1x128xf32>
    %33 = arith.maximumf %26, %30 : vector<1x128xf32>
    %34 = arith.minimumf %25, %29 : vector<1x128xf32>
    %35 = arith.minimumf %27, %31 : vector<1x128xf32>
    %36 = arith.mulf %5, %7 : vector<1x128xf32>
    %37 = arith.mulf %13, %15 : vector<1x128xf32>
    %38 = arith.cmpf olt, %32, %34 : vector<1x128xf32>
    %39 = arith.cmpf olt, %33, %35 : vector<1x128xf32>
    %40 = arith.andi %38, %39 : vector<1x128xi1>
    %41 = arith.extui %40 : vector<1x128xi1> to vector<1x128xi32>
    %42 = arith.sitofp %41 : vector<1x128xi32> to vector<1x128xf32>
    %43 = arith.subf %34, %32 : vector<1x128xf32>
    %44 = arith.subf %35, %33 : vector<1x128xf32>
    %45 = arith.mulf %43, %44 : vector<1x128xf32>
    %46 = arith.mulf %45, %42 : vector<1x128xf32>
    %47 = arith.addf %36, %37 : vector<1x128xf32>
    %48 = arith.subf %47, %46 : vector<1x128xf32>
    %cst_23 = arith.constant 1.000000e-16 : f32
    %49 = vector.broadcast %cst_23 : f32 to vector<1x128xf32>
    %50 = arith.addf %48, %49 : vector<1x128xf32>
    %51 = arith.divf %46, %50 : vector<1x128xf32>
    %52 = arith.mulf %51, %51 : vector<1x128xf32>
    %cst_24 = arith.constant 1.000000e+00 : f32
    %53 = vector.broadcast %cst_24 : f32 to vector<1x128xf32>
    %54 = arith.subf %53, %52 : vector<1x128xf32>
    %c0_25 = arith.constant 0 : index
    %c0_26 = arith.constant 0 : index
    %55 = vector.load %arg3[%c0_25, %c0_26] : memref<1x128xf32, #tpu.memory_space<vmem>>, vector<1x128xf32>
    tpu.vector_store %arg3[%c0_25, %c0_26], %54 {strides = array<i32>} : memref<1x128xf32, #tpu.memory_space<vmem>>, vector<1x128xf32>,
    return
  }
  func.func @transform_0(%arg0: i32) -> (i32, i32, i32) {
    %c0_i32 = arith.constant 0 : i32
    %c0_i32_0 = arith.constant 0 : i32
    %c0_i32_1 = arith.constant 0 : i32
    return %c0_i32, %arg0, %c0_i32_0 : i32, i32, i32
  }
  func.func @transform_1(%arg0: i32) -> (i32, i32, i32) {
    %c0_i32 = arith.constant 0 : i32
    %c0_i32_0 = arith.constant 0 : i32
    %c0_i32_1 = arith.constant 0 : i32
    return %c0_i32, %arg0, %c0_i32_0 : i32, i32, i32
  }
  func.func @transform_2(%arg0: i32) -> (i32, i32) {
    %c0_i32 = arith.constant 0 : i32
    %c0_i32_0 = arith.constant 0 : i32
    return %arg0, %c0_i32 : i32, i32
  }
}

</mosaic_0001>

<llo_original>
// kernel: tpu_custom_call.1
$region0: #{tpu_custom_call.1}
  #allocation0 [shape = 'u32[]', space=smem, size = 0x4, offset = 0x4, fixed_abs, tag = 'smem constant byte address 0x4 - core index']
  #allocation1 [shape = 'u32[144,128]{1,0:T(1,128)}', space=vmem, size = 0x12000, scoped, tag = 'internal scratch']
  %s0 = inlined_call_operand.hbm [shape: f32[4,1,128], index: 0, kind: input, shape index: {}]
  %s1 = inlined_call_operand.hbm [shape: f32[4,1,128], index: 1, kind: input, shape index: {}]
  %s2 = inlined_call_operand.hbm [shape: f32[1,128], index: 2, kind: output, shape index: {}]
  %s3 = sld [smem:[#allocation0]]
  $region26: #{tpu_custom_call.1} parent=0
    _
  %s5 = ssub.s32 1, %s3
  %s6 = scalar_select 0, %s5, %s3
  $region1: #{tpu_custom_call.1} parent=0
    #allocation2 [shape = 'u8[2048]{0}', space=vmem, size = 0x800, scoped, tag = 'input window, operand 0, single buffered']
    #allocation3 [shape = 's32[1]{0}', space=sflag, size = 0x4, scoped, tag = 'scoped memory for tpu_custom_call.1']
    #allocation4 [shape = 's32[1]{0}', space=sflag, size = 0x4, scoped, tag = 'scoped memory for tpu_custom_call.1']
    #allocation5 [shape = 'u8[2048]{0}', space=vmem, size = 0x800, scoped, tag = 'input window, operand 1, single buffered']
    #allocation6 [shape = 's32[1]{0}', space=sflag, size = 0x4, scoped, tag = 'scoped memory for tpu_custom_call.1']
    #allocation7 [shape = 'u8[512]{0}', space=vmem, size = 0x400, scoped, tag = 'output window, operand 0, single buffered']
    %7 = vsyncpa [#allocation3], 0
    %8 = vsyncpa [#allocation6], 0
    %9 = vsyncpa [#allocation4], 0
    // Predicated region
    $region2: #{tpu_custom_call.1} parent=1 // pred_check
      _
    $region3: #{tpu_custom_call.1} parent=1 // pred_check_branch
      %11 = sbr.rel (0) target = $region5
    $region4: #{tpu_custom_call.1} parent=1 // pred_region
      %s13 = ssub.s32 64, 64
      %14 = vsyncadd [#allocation3], %s13
      %s15 = sshll.u32 [#allocation2], 4
      %s16 = int_to_ptr.vmem [resolvable:$true] %s15
      %21 = dma.hbm_to_vmem [thread:$0]  %s0, 64, %s16, [#allocation3], 16, 16, 1
    $region5: #{tpu_custom_call.1} parent=1 // pred_fallthru
      _
    // Predicated region
    $region6: #{tpu_custom_call.1} parent=1 // pred_check
      _
    $region7: #{tpu_custom_call.1} parent=1 // pred_check_branch
      %23 = sbr.rel (0) target = $region9
    $region8: #{tpu_custom_call.1} parent=1 // pred_region
      %s25 = ssub.s32 64, 64
      %26 = vsyncadd [#allocation6], %s25
      %s27 = sshll.u32 [#allocation5], 4
      %s28 = int_to_ptr.vmem [resolvable:$true] %s27
      %33 = dma.hbm_to_vmem [thread:$0]  %s1, 64, %s28, [#allocation6], 16, 16, 1
    $region9: #{tpu_custom_call.1} parent=1 // pred_fallthru
      _
    // Predicated region
    $region10: #{tpu_custom_call.1} parent=1 // pred_check
      _
    $region11: #{tpu_custom_call.1} parent=1 // pred_check_branch
      %35 = sbr.rel (0) target = $region13
    $region12: #{tpu_custom_call.1} parent=1 // pred_region
      %36 = dma.done [#allocation3], 64
    $region13: #{tpu_custom_call.1} parent=1 // pred_fallthru
      _
    // Predicated region
    $region14: #{tpu_custom_call.1} parent=1 // pred_check
      _
    $region15: #{tpu_custom_call.1} parent=1 // pred_check_branch
      %38 = sbr.rel (0) target = $region17
    $region16: #{tpu_custom_call.1} parent=1 // pred_region
      %39 = dma.done [#allocation6], 64
    $region17: #{tpu_custom_call.1} parent=1 // pred_fallthru
      _
    %v40 = vld [vmem:[#allocation2] sm:$0x1]
    %s41 = scalar_lea.vmem [#allocation2], 1
    %v42 = vld [vmem:[%s41] sm:$0x1]
    %s43 = scalar_lea.vmem [#allocation2], 2
    %v44 = vld [vmem:[%s43] sm:$0x1]
    %s45 = scalar_lea.vmem [#allocation2], 3
    %v46 = vld [vmem:[%s45] sm:$0x1]
    %v47 = vld [vmem:[#allocation5] sm:$0x1]
    %s48 = scalar_lea.vmem [#allocation5], 1
    %v49 = vld [vmem:[%s48] sm:$0x1]
    %s50 = scalar_lea.vmem [#allocation5], 2
    %v51 = vld [vmem:[%s50] sm:$0x1]
    %s52 = scalar_lea.vmem [#allocation5], 3
    %v53 = vld [vmem:[%s52] sm:$0x1]
    %v54 = vmul.f32 %v44, 0.5
    %v55 = vmul.f32 %v46, 0.5
    %v56 = vmul.f32 %v51, 0.5
    %v57 = vmul.f32 %v53, 0.5
    %v58 = vsub.f32 %v40, %v54
    %v59 = vadd.f32 %v40, %v54
    %v60 = vsub.f32 %v42, %v55
    %v61 = vadd.f32 %v42, %v55
    %v62 = vsub.f32 %v47, %v56
    %v63 = vadd.f32 %v47, %v56
    %v64 = vsub.f32 %v49, %v57
    %v65 = vadd.f32 %v49, %v57
    %v66 = vmax.f32 %v58, %v62
    %v67 = vmax.f32 %v60, %v64
    %v68 = vmin.f32 %v59, %v63
    %v69 = vmin.f32 %v61, %v65
    %v70 = vmul.f32 %v44, %v46
    %v71 = vmul.f32 %v51, %v53
    %vm72 = vcmp.lt.f32.partialorder %v66, %v68
    %vm73 = vcmp.lt.f32.partialorder %v67, %v69
    %vm74 = vmand %vm72, %vm73
    %v75 = vsel %vm74, 1, 0
    %v76 = vcvt.s32.f32 %v75
    %v77 = vsub.f32 %v68, %v66
    %v78 = vsub.f32 %v69, %v67
    %v79 = vmul.f32 %v77, %v78
    %v80 = vmul.f32 %v79, %v76
    %v81 = vadd.f32 %v70, %v71
    %v82 = vsub.f32 %v81, %v80
    %v83 = vadd.f32 %v82, 1e-16
    %v84 = vrcp.pop %v83
    %v85 = vmul.f32 %v80, %v84
    %v86 = vmul.f32 %v85, %v85
    %v87 = vsub.f32 1.0, %v86
    %88 = vst [vmem:[#allocation7] sm:$0x1] %v87
    // Predicated region
    $region18: #{tpu_custom_call.1} parent=1 // pred_check
      _
    $region19: #{tpu_custom_call.1} parent=1 // pred_check_branch
      %90 = sbr.rel (0) target = $region21
    $region20: #{tpu_custom_call.1} parent=1 // pred_region
      %s92 = ssub.s32 16, 16
      %93 = vsyncadd [#allocation4], %s92
      %s95 = sshll.u32 [#allocation7], 4
      %s96 = int_to_ptr.vmem [resolvable:$true] %s95
      %98 = dma.vmem_to_hbm [thread:$0]  %s96, 16, %s2, [#allocation4]
    $region21: #{tpu_custom_call.1} parent=1 // pred_fallthru
      _
    // Predicated region
    $region22: #{tpu_custom_call.1} parent=1 // pred_check
      _
    $region23: #{tpu_custom_call.1} parent=1 // pred_check_branch
      %100 = sbr.rel (0) target = $region25
    $region24: #{tpu_custom_call.1} parent=1 // pred_region
      %101 = dma.done [#allocation4], 16
    $region25: #{tpu_custom_call.1} parent=1 // pred_fallthru
      _
    %102 = vsyncpa [#allocation3], 1
    %103 = vsyncpa [#allocation6], 1
    %104 = vsyncpa [#allocation4], 1

</llo_original>
